<compile_context>
chip_gen: v5e
topology: v5e:2x2
jax: 0.10.0
libtpu: 0.0.40
codegen_flags: <defaults>
</compile_context>

<pallas_src>
import functools
import types

import jax
import jax.numpy as jnp
from jax.experimental import pallas as pl
from jax.experimental.pallas import tpu as pltpu


# Matmul-operand dtype (accumulation stays f32 via preferred_element_type).
MATMUL_DTYPE = jnp.bfloat16


# ----------------------------------------------------------------------------
# Kernel 1: tiled matmul + bias + optional ReLU (conv trunk over im2col rows).
# M is tiled "parallel"; a ragged last block is fine because rows are
# independent and out-of-bounds writes are dropped (no jnp.pad / [:M] slice).
# ----------------------------------------------------------------------------
def _matmul_bias_relu_kernel(x_ref, w_ref, b_ref, o_ref, *, relu):
    acc = jnp.dot(x_ref[...], w_ref[...], preferred_element_type=jnp.float32)
    acc = acc + b_ref[...]
    if relu:
        acc = jnp.maximum(acc, 0.0)
    o_ref[...] = acc.astype(o_ref.dtype)


def pallas_linear(x, w, b, *, relu=False, tile_m=512, out_dtype=None):
    """y = relu?(x @ w + b).  x:(M,K), w:(K,N) bf16 operands, b:(N,) f32."""
    M, K = x.shape
    K2, N = w.shape
    assert K == K2
    out_dtype = out_dtype or x.dtype
    x = x.astype(MATMUL_DTYPE)
    w = w.astype(MATMUL_DTYPE)
    b2 = b.reshape(1, N).astype(jnp.float32)
    tm = M if M <= tile_m else tile_m
    return pl.pallas_call(
        functools.partial(_matmul_bias_relu_kernel, relu=relu),
        out_shape=jax.ShapeDtypeStruct((M, N), out_dtype),
        grid=(pl.cdiv(M, tm),),
        in_specs=[
            pl.BlockSpec((tm, K), lambda i: (i, 0)),
            pl.BlockSpec((K, N), lambda i: (0, 0)),
            pl.BlockSpec((1, N), lambda i: (0, 0)),
        ],
        out_specs=pl.BlockSpec((tm, N), lambda i: (i, 0)),
        compiler_params=pltpu.CompilerParams(
            dimension_semantics=("parallel",)),
    )(x, w, b2)


# ----------------------------------------------------------------------------
# Kernel 2: fully fused dueling head with a (batch, conv_out-reduction) grid.
#   feat --NoisyLinear(val1/adv1)+ReLU--> h_v/h_a --NoisyLinear(val2/adv2)-->
#   dueling combine --> (log_)softmax over bins, all lane-dense.
# NoisyLinear uses the identity  y = x@mu + ((x*eps_in)@sigma)*eps_out + b,
# so no effective weight is ever materialised; layer-1 mu/sigma stream per
# K tile into the f32 accumulators hv_acc/ha_acc.
# ----------------------------------------------------------------------------
def _rainbow_head_kernel(
        feat_ref, featv_ref, feata_ref,
        v1_mu, v1_sg, v1_eo, v1_b,
        a1_mu, a1_sg, a1_eo, a1_b,
        v2_mu, v2_sg, v2_ei, v2_eo, v2_b,
        a2_mu, a2_sg, a2_ei, a2_eo, a2_b,
        same_bin_ref, same_act_ref, tile_val_ref,
        o_ref, hv_acc, ha_acc, *, actions, log):
    k = pl.program_id(1)
    nk = pl.num_programs(1)

    @pl.when(k == 0)
    def _():
        hv_acc[...] = jnp.zeros_like(hv_acc)
        ha_acc[...] = jnp.zeros_like(ha_acc)

    # Layer-1 partial sums over this K tile (eps_in already folded into
    # featv/feata by the wrapper; bias added in the finalize step).
    x, xv, xa = feat_ref[...], featv_ref[...], feata_ref[...]
    hv_acc[...] += (
        jnp.dot(x, v1_mu[...], preferred_element_type=jnp.float32)
        + jnp.dot(xv, v1_sg[...], preferred_element_type=jnp.float32)
        * v1_eo[...])
    ha_acc[...] += (
        jnp.dot(x, a1_mu[...], preferred_element_type=jnp.float32)
        + jnp.dot(xa, a1_sg[...], preferred_element_type=jnp.float32)
        * a1_eo[...])

    @pl.when(k == nk - 1)
    def _():
        h_v = jnp.maximum(hv_acc[...] + v1_b[...], 0.0)      # (tb, H) f32
        h_a = jnp.maximum(ha_acc[...] + a1_b[...], 0.0)

        def noisy2(h, mu, sg, ei, eo, b):
            hb = h.astype(MATMUL_DTYPE)
            hn = (h * ei[...]).astype(MATMUL_DTYPE)
            return (jnp.dot(hb, mu[...], preferred_element_type=jnp.float32)
                    + jnp.dot(hn, sg[...], preferred_element_type=jnp.float32)
                    * eo[...] + b[...])

        val = noisy2(h_v, v2_mu, v2_sg, v2_ei, v2_eo, v2_b)   # (tb, bins)
        adv = noisy2(h_a, a2_mu, a2_sg, a2_ei, a2_eo, a2_b)   # (tb, A*bins)

        # Dueling combine + per-action softmax kept lane-dense in the flat
        # (tb, A*bins) layout via tiny constant 0/1 matrices on the MXU.
        mean_t = jnp.dot(adv, same_bin_ref[...],
                         preferred_element_type=jnp.float32) * (1.0 / actions)
        val_t = jnp.dot(val, tile_val_ref[...],
                        preferred_element_type=jnp.float32)
        q = val_t + adv - mean_t
        # A global row max is enough for stability (softmax is shift
        # invariant per action segment).
        m = jnp.max(q, axis=-1, keepdims=True)
        z = q - m
        e = jnp.exp(z)
        s_t = jnp.dot(e, same_act_ref[...],
                      preferred_element_type=jnp.float32)     # per-action sums
        if log:
            o_ref[...] = z - jnp.log(s_t)
        else:
            o_ref[...] = e * pl.reciprocal(s_t, approx=True)


def _pick_k_tile(k, max_tile=512):
    """Largest lane-aligned (x128) divisor of k (<= max_tile), else no tiling."""
    if k <= max_tile:
        return k
    t = (max_tile // 128) * 128
    while t >= 128:
        if k % t == 0:
            return t
        t -= 128
    # TODO(synk): zero-pad the K axis at init when no aligned divisor exists so
    # the reduction can still be tiled (not needed at these shapes).
    return k


def pallas_rainbow_head(feat, featv, feata, head, *, actions, bins, log,
                        tile_b=128):
    B, K1 = feat.shape
    H = head["val1"]["mu"].shape[1]
    AB = actions * bins
    kt = _pick_k_tile(K1)
    tb = B if B <= tile_b else tile_b
    grid = (pl.cdiv(B, tb), K1 // kt)

    # Constant 0/1 combine matrices (built outside the kernel; tiny).
    idx = jnp.arange(AB)
    same_bin = ((idx[:, None] % bins) == (idx[None, :] % bins)
                ).astype(jnp.float32)
    same_act = ((idx[:, None] // bins) == (idx[None, :] // bins)
                ).astype(jnp.float32)
    tile_val = (jnp.arange(bins)[:, None] == (idx[None, :] % bins)
                ).astype(jnp.float32)

    v1, a1, v2, a2 = head["val1"], head["adv1"], head["val2"], head["adv2"]
    inputs = [feat, featv, feata,
              v1["mu"], v1["sig"], v1["eo"], v1["b"],
              a1["mu"], a1["sig"], a1["eo"], a1["b"],
              v2["mu"], v2["sig"], v2["ei"], v2["eo"], v2["b"],
              a2["mu"], a2["sig"], a2["ei"], a2["eo"], a2["b"],
              same_bin, same_act, tile_val]

    bspec = pl.BlockSpec((tb, kt), lambda b, k: (b, k))
    l1w = pl.BlockSpec((kt, H), lambda b, k: (k, 0))

    def const(shape):
        return pl.BlockSpec(shape, lambda b, k: (0, 0))

    in_specs = [bspec, bspec, bspec,
                l1w, l1w, const((1, H)), const((1, H)),
                l1w, l1w, const((1, H)), const((1, H)),
                const((H, bins)), const((H, bins)), const((1, H)),
                const((1, bins)), const((1, bins)),
                const((H, AB)), const((H, AB)), const((1, H)),
                const((1, AB)), const((1, AB)),
                const((AB, AB)), const((AB, AB)), const((bins, AB))]

    out2d = pl.pallas_call(
        functools.partial(_rainbow_head_kernel, actions=actions, log=log),
        out_shape=jax.ShapeDtypeStruct((B, AB), jnp.float32),
        grid=grid,
        in_specs=in_specs,
        out_specs=pl.BlockSpec((tb, AB), lambda b, k: (b, 0)),
        scratch_shapes=[pltpu.VMEM((tb, H), jnp.float32),
                        pltpu.VMEM((tb, H), jnp.float32)],
        compiler_params=pltpu.CompilerParams(
            dimension_semantics=("parallel", "arbitrary")),
    )(*inputs)
    return out2d.reshape(B, actions, bins)


# ----------------------------------------------------------------------------
# Glue: im2col, parameter init, noise vectors
# ----------------------------------------------------------------------------
def im2col(x, kh, kw, sh, sw):
    """x: (B,H,W,C) NHWC -> patches (B,OH,OW, kh*kw*C) ordered (i, j, c)."""
    # TODO(synk): for production 84x84 frames, fold this im2col into the conv
    # matmul kernel (overlapping-window index_map / manual DMA) to avoid the
    # kh*kw x HBM inflation of the activation tensor.
    B, H, W, C = x.shape
    OH = (H - kh) // sh + 1
    OW = (W - kw) // sw + 1
    cols = []
    for i in range(kh):
        for j in range(kw):
            cols.append(x[:, i:i + OH * sh:sh, j:j + OW * sw:sw, :])
    return jnp.concatenate(cols, axis=-1), OH, OW


def init_params(key, args):
    params = {"convs": []}
    channels = (args.state_size, *args.channels)
    frame = args.frame_size
    for i in range(len(channels) - 1):
        cin, cout = channels[i], channels[i + 1]
        k, s = args.kernels[i], args.strides[i]
        key, kw_, kb_ = jax.random.split(key, 3)
        bound = 1.0 / (cin * k * k) ** 0.5
        w_oihw = jax.random.uniform(kw_, (cout, cin, k, k), jnp.float32,
                                    -bound, bound)
        b = jax.random.uniform(kb_, (cout,), jnp.float32, -bound, bound)
        # matmul layout with rows ordered (ki, kj, cin) to match im2col; built
        # ONCE at init (stored bf16) so the forward never transposes weights.
        w_mat = jnp.transpose(w_oihw, (2, 3, 1, 0)).reshape(k * k * cin, cout)
        params["convs"].append({"w_oihw": w_oihw,
                                "w_mat": w_mat.astype(MATMUL_DTYPE),
                                "b": b, "stride": s, "kernel": k})
        frame = (frame - k) // s + 1
    c_last = channels[-1]
    conv_out = c_last * frame * frame

    # NHWC-flatten -> NCHW-flatten row permutation: applied once to val1/adv1
    # weight rows so the conv output can be flattened directly in NHWC order
    # (no per-forward transpose), while matching PyTorch's NCHW flatten.
    idx = jnp.arange(conv_out)
    hh = idx // (frame * c_last)
    ww = (idx // c_last) % frame
    cc = idx % c_last
    params["feat_perm"] = cc * frame * frame + hh * frame + ww

    def noisy_init(key, in_f, out_f, row_perm=None):
        k1, k2 = jax.random.split(key)
        mu_bound = 1.0 / in_f ** 0.5
        sigma_const = args.sigma_zero / in_f ** 0.5
        mu_wT = jax.random.uniform(k1, (in_f, out_f), jnp.float32,
                                   -mu_bound, mu_bound)
        sig_wT = jnp.full((in_f, out_f), sigma_const, jnp.float32)
        mu_k = mu_wT if row_perm is None else mu_wT[row_perm]
        sig_k = sig_wT if row_perm is None else sig_wT[row_perm]
        return {
            # f32 masters in (in, out) layout, rows in NCHW order (reference).
            "mu_wT": mu_wT, "sig_wT": sig_wT,
            "mu_b": jax.random.uniform(k2, (out_f,), jnp.float32,
                                       -mu_bound, mu_bound),
            "sig_b": jnp.full((out_f,), sigma_const, jnp.float32),
            # bf16 kernel copies (rows permuted to NHWC for layer-1 heads).
            "mu_k": mu_k.astype(MATMUL_DTYPE),
            "sig_k": sig_k.astype(MATMUL_DTYPE),
            "in_f": in_f, "out_f": out_f,
        }

    key, k1, k2, k3, k4 = jax.random.split(key, 5)
    perm = params["feat_perm"]
    params["val1"] = noisy_init(k1, conv_out, args.hidden_features, perm)
    params["val2"] = noisy_init(k2, args.hidden_features, args.bins)
    params["adv1"] = noisy_init(k3, conv_out, args.hidden_features, perm)
    params["adv2"] = noisy_init(k4, args.hidden_features,
                                args.actions * args.bins)
    return params


def make_head_noise(params, key):
    """Factorised-Gaussian noise vectors f(eps)=sign(eps)*sqrt(|eps|)."""
    f = lambda e: jnp.sign(e) * jnp.sqrt(jnp.abs(e))
    noise = {}
    for name, k in zip(("val1", "val2", "adv1", "adv2"),
                       jax.random.split(key, 4)):
        p = params[name]
        k1, k2 = jax.random.split(k)
        eps_in = f(jax.random.normal(k1, (p["in_f"],), jnp.float32))
        eps_out = f(jax.random.normal(k2, (p["out_f"],), jnp.float32))
        noise[name] = {"eps_in": eps_in, "eps_out": eps_out}
    return noise


# ----------------------------------------------------------------------------
# Forward pass (matches Network.forward semantics)
# ----------------------------------------------------------------------------
def network_forward(params, x_nchw, args, noise, log=False):
    B = x_nchw.shape[0]
    x = jnp.transpose(x_nchw, (0, 2, 3, 1)).astype(MATMUL_DTYPE)  # NCHW->NHWC
    for layer in params["convs"]:
        k, s = layer["kernel"], layer["stride"]
        cout = layer["b"].shape[0]
        patches, OH, OW = im2col(x, k, k, s, s)                   # bf16
        y = pallas_linear(patches.reshape(B * OH * OW, patches.shape[-1]),
                          layer["w_mat"], layer["b"], relu=True)
        x = y.reshape(B, OH, OW, cout)

    # TODO(synk): x.register_hook(lambda g: g * self.factor) only rescales the
    # backward gradient; it has no forward effect, so it is omitted here.

    # NHWC flatten is a free reshape (val1/adv1 weight rows were permuted at
    # init to match), so no transpose of the conv output is needed.
    feat = x.reshape(B, -1)

    perm = params["feat_perm"]
    ei_v = noise["val1"]["eps_in"][perm]
    ei_a = noise["adv1"]["eps_in"][perm]
    featv = (feat * ei_v[None, :]).astype(MATMUL_DTYPE)   # eps_in pre-folded
    feata = (feat * ei_a[None, :]).astype(MATMUL_DTYPE)

    head = {}
    for name in ("val1", "adv1", "val2", "adv2"):
        p, n = params[name], noise[name]
        head[name] = {
            "mu": p["mu_k"],
            "sig": p["sig_k"],
            "ei": n["eps_in"].reshape(1, -1),
            "eo": n["eps_out"].reshape(1, -1),
            "b": (p["mu_b"] + p["sig_b"] * n["eps_out"]).reshape(1, -1),
        }
    return pallas_rainbow_head(feat, featv, feata, head,
                               actions=args.actions, bins=args.bins, log=log)


# ----------------------------------------------------------------------------
# Pure-JAX f32 reference (mirrors the PyTorch module) for correctness checks
# ----------------------------------------------------------------------------
def reference_forward(params, x_nchw, args, noise, log=False):
    B = x_nchw.shape[0]
    x = x_nchw
    for layer in params["convs"]:
        s = layer["stride"]
        x = jax.lax.conv_general_dilated(
            x, layer["w_oihw"], window_strides=(s, s), padding="VALID",
            dimension_numbers=("NCHW", "OIHW", "NCHW"),
            precision=jax.lax.Precision.HIGHEST)
        x = jax.nn.relu(x + layer["b"].reshape(1, -1, 1, 1))
    feat = x.reshape(B, -1)

    def noisy_linear(xin, p, n):
        eps_in, eps_out = n["eps_in"], n["eps_out"]
        w = p["mu_wT"] + p["sig_wT"] * (eps_in[:, None] * eps_out[None, :])
        b = p["mu_b"] + p["sig_b"] * eps_out
        return jnp.dot(xin, w, precision=jax.lax.Precision.HIGHEST) + b

    h_v = jax.nn.relu(noisy_linear(feat, params["val1"], noise["val1"]))
    val = noisy_linear(h_v, params["val2"], noise["val2"]).reshape(
        B, 1, args.bins)
    h_a = jax.nn.relu(noisy_linear(feat, params["adv1"], noise["adv1"]))
    adv = noisy_linear(h_a, params["adv2"], noise["adv2"]).reshape(
        B, args.actions, args.bins)
    q = val + adv - jnp.mean(adv, axis=1, keepdims=True)
    return jax.nn.log_softmax(q, axis=2) if log else jax.nn.softmax(q, axis=2)


# ----------------------------------------------------------------------------
if __name__ == "__main__":
    args = types.SimpleNamespace(
        frame_size=16,
        state_size=4,
        channels=(8, 16),
        kernels=(4, 3),
        strides=(2, 2),
        hidden_features=32,
        actions=4,
        bins=8,
        sigma_zero=0.5,
        factor=0.5,
    )

    root = jax.random.PRNGKey(0)
    k_params, k_input, k_noise = jax.random.split(root, 3)

    params = init_params(k_params, args)
    x = jax.random.normal(k_input, (2, args.state_size, args.frame_size,
                                    args.frame_size), jnp.float32)
    noise = make_head_noise(params, k_noise)

    out = network_forward(params, x, args, noise, log=False)
    out = jax.block_until_ready(out)

    assert out.shape == (2, args.actions, args.bins), out.shape
    # distributional softmax: each (batch, action) row sums to 1 over bins
    # (approx reciprocal on the EUP -> ~1e-3-level tolerance).
    assert bool(jnp.allclose(jnp.sum(out, axis=2), 1.0, atol=5e-3))

    # compare against a pure-JAX f32 reference of the PyTorch module; bf16
    # matmul operands dominate the (small) difference.
    ref = reference_forward(params, x, args, noise, log=False)
    assert bool(jnp.allclose(out, ref, atol=5e-3, rtol=5e-3)), \
        float(jnp.max(jnp.abs(out - ref)))

    # log_softmax branch
    log_out = jax.block_until_ready(
        network_forward(params, x, args, noise, log=True))
    log_ref = reference_forward(params, x, args, noise, log=True)
    assert bool(jnp.allclose(log_out, log_ref, atol=5e-3, rtol=5e-3)), \
        float(jnp.max(jnp.abs(log_out - log_ref)))

    print("KERNEL_OK")
</pallas_src>

<mosaic_0001>
module attributes {stable_mosaic.version = 11 : i64} {
  func.func @_matmul_bias_relu_kernel(%arg0: i32, %arg1: memref<98x64xbf16, #tpu.memory_space<vmem>>, %arg2: memref<64x8xbf16, #tpu.memory_space<vmem>>, %arg3: memref<1x8xf32, #tpu.memory_space<vmem>>, %arg4: memref<98x8xbf16, #tpu.memory_space<vmem>>) attributes {dimension_semantics = [#tpu.dimension_semantics<parallel>], iteration_bounds = array<i64: 1>, scalar_prefetch = 0 : i64, scratch_operands = 0 : i64, tpu.core_type = #tpu.core_type<tc>, window_params = [{transform_indices = @transform_0, window_bounds = array<i64: 98, 64>}, {pipeline_mode = #tpu.pipeline_mode<synchronous>, transform_indices = @transform_1, window_bounds = array<i64: 64, 8>}, {pipeline_mode = #tpu.pipeline_mode<synchronous>, transform_indices = @transform_2, window_bounds = array<i64: 1, 8>}, {transform_indices = @transform_3, window_bounds = array<i64: 98, 8>}]} {
    %c0 = arith.constant 0 : index
    %c0_0 = arith.constant 0 : index
    %0 = vector.load %arg1[%c0, %c0_0] : memref<98x64xbf16, #tpu.memory_space<vmem>>, vector<98x64xbf16>
    %c0_1 = arith.constant 0 : index
    %c0_2 = arith.constant 0 : index
    %1 = vector.load %arg2[%c0_1, %c0_2] : memref<64x8xbf16, #tpu.memory_space<vmem>>, vector<64x8xbf16>
    %cst = arith.constant dense<0.000000e+00> : vector<98x8xf32>
    %2 = tpu.matmul %0, %1, %cst {dimension_numbers = #tpu.dot_dimension_numbers<[1], [0], [0], [1], [0, 0, 1, 1], [], []>} : vector<98x64xbf16>, vector<64x8xbf16>, vector<98x8xf32> -> vector<98x8xf32>
    %c0_3 = arith.constant 0 : index
    %c0_4 = arith.constant 0 : index
    %3 = vector.load %arg3[%c0_3, %c0_4] : memref<1x8xf32, #tpu.memory_space<vmem>>, vector<1x8xf32>
    %4 = vector.broadcast %3 : vector<1x8xf32> to vector<98x8xf32>
    %5 = arith.addf %2, %4 : vector<98x8xf32>
    %cst_5 = arith.constant 0.000000e+00 : f32
    %6 = vector.broadcast %cst_5 : f32 to vector<98x8xf32>
    %7 = arith.maximumf %5, %6 : vector<98x8xf32>
    %8 = arith.truncf %7 : vector<98x8xf32> to vector<98x8xbf16>
    %c0_6 = arith.constant 0 : index
    %c0_7 = arith.constant 0 : index
    %9 = vector.load %arg4[%c0_6, %c0_7] : memref<98x8xbf16, #tpu.memory_space<vmem>>, vector<98x8xbf16>
    tpu.vector_store %arg4[%c0_6, %c0_7], %8 {strides = array<i32>} : memref<98x8xbf16, #tpu.memory_space<vmem>>, vector<98x8xbf16>,
    return
  }
  func.func @transform_0(%arg0: i32) -> (i32, i32) {
    %c0_i32 = arith.constant 0 : i32
    %c0_i32_0 = arith.constant 0 : i32
    return %arg0, %c0_i32 : i32, i32
  }
  func.func @transform_1(%arg0: i32) -> (i32, i32) {
    %c0_i32 = arith.constant 0 : i32
    %c0_i32_0 = arith.constant 0 : i32
    %c0_i32_1 = arith.constant 0 : i32
    return %c0_i32, %c0_i32_0 : i32, i32
  }
  func.func @transform_2(%arg0: i32) -> (i32, i32) {
    %c0_i32 = arith.constant 0 : i32
    %c0_i32_0 = arith.constant 0 : i32
    %c0_i32_1 = arith.constant 0 : i32
    return %c0_i32, %c0_i32_0 : i32, i32
  }
  func.func @transform_3(%arg0: i32) -> (i32, i32) {
    %c0_i32 = arith.constant 0 : i32
    %c0_i32_0 = arith.constant 0 : i32
    return %arg0, %c0_i32 : i32, i32
  }
}

</mosaic_0001>

<llo_original>
// kernel: tpu_custom_call.1
$region0: #{tpu_custom_call.1}
  #allocation0 [shape = 'u32[]', space=smem, size = 0x4, offset = 0x4, fixed_abs, tag = 'smem constant byte address 0x4 - core index']
  #allocation1 [shape = 'u32[72,128]{1,0:T(1,128)}', space=vmem, size = 0x9000, scoped, tag = 'internal scratch']
  %s0 = inlined_call_operand.vmem [shape: bf16[98,64], index: 0, kind: input, shape index: {}]
  %s1 = inlined_call_operand.vmem [shape: bf16[64,8], index: 1, kind: input, shape index: {}]
  %s2 = inlined_call_operand.vmem [shape: f32[1,8], index: 2, kind: input, shape index: {}]
  %s3 = inlined_call_operand.vmem [shape: bf16[98,8], index: 3, kind: output, shape index: {}]
  %s4 = sld [smem:[#allocation0]]
  $region22: #{tpu_custom_call.1} parent=0
    _
  %s6 = ssub.s32 1, %s4
  %s7 = scalar_select 0, %s6, %s4
  // Predicated region
  $region2: #{tpu_custom_call.1} parent=0 // pred_check
    _
  $region3: #{tpu_custom_call.1} parent=0 // pred_check_branch
    %9 = sbr.rel (0) target = $region5
  $region4: #{tpu_custom_call.1} parent=0 // pred_region
    _
  $region5: #{tpu_custom_call.1} parent=0 // pred_fallthru
    _
  // Predicated region
  $region6: #{tpu_custom_call.1} parent=0 // pred_check
    _
  $region7: #{tpu_custom_call.1} parent=0 // pred_check_branch
    %11 = sbr.rel (0) target = $region9
  $region8: #{tpu_custom_call.1} parent=0 // pred_region
    _
  $region9: #{tpu_custom_call.1} parent=0 // pred_fallthru
    _
  // Predicated region
  $region10: #{tpu_custom_call.1} parent=0 // pred_check
    _
  $region11: #{tpu_custom_call.1} parent=0 // pred_check_branch
    %13 = sbr.rel (0) target = $region13
  $region12: #{tpu_custom_call.1} parent=0 // pred_region
    _
  $region13: #{tpu_custom_call.1} parent=0 // pred_fallthru
    _
  %v15 = vld [vmem:[%s0] sm:$0xf]
  %v16 = vld [vmem:[%s0 + $0x4] sm:$0xf]
  %v17 = vld [vmem:[%s0 + $0x8] sm:$0xf]
  %v18 = vld [vmem:[%s0 + $0xc] sm:$0xf]
  %v19 = vld [vmem:[%s0 + $0x10] sm:$0xf]
  %v20 = vld [vmem:[%s0 + $0x14] sm:$0xf]
  %v21 = vld [vmem:[%s0 + $0x18] sm:$0xf]
  %v22 = vld [vmem:[%s0 + $0x1c] sm:$0xf]
  %v23 = vld [vmem:[%s0 + $0x20] sm:$0xf]
  %v24 = vld [vmem:[%s0 + $0x24] sm:$0xf]
  %v25 = vld [vmem:[%s0 + $0x28] sm:$0xf]
  %v26 = vld [vmem:[%s0 + $0x2c] sm:$0xf]
  %v27 = vld [vmem:[%s0 + $0x30] sm:$0x1]
  %v28 = vld [vmem:[%s1] sm:$0xf]
  %v29 = vld [vmem:[%s1 + $0x4] sm:$0xf]
  %v30 = vld [vmem:[%s1 + $0x8] sm:$0xf]
  %v31 = vld [vmem:[%s1 + $0xc] sm:$0xf]
  %v32 = vld [vmem:[%s1 + $0x10] sm:$0xf]
  %v33 = vld [vmem:[%s1 + $0x14] sm:$0xf]
  %v34 = vld [vmem:[%s1 + $0x18] sm:$0xf]
  %v35 = vld [vmem:[%s1 + $0x1c] sm:$0xf]
  %v36 = vld [vmem:[%s2] sm:$0x1]
  %v38 = vperm.slane %v36, 0
  %v53 = vunpack.c.l.b16 %v15
  %v54 = vunpack.c.l.b16 %v16
  %v55 = vunpack.c.l.b16 %v17
  %v56 = vunpack.c.l.b16 %v18
  %v57 = vunpack.c.l.b16 %v19
  %v58 = vunpack.c.l.b16 %v20
  %v59 = vunpack.c.l.b16 %v21
  %v60 = vunpack.c.l.b16 %v22
  %v61 = vunpack.c.l.b16 %v23
  %v62 = vunpack.c.l.b16 %v24
  %v63 = vunpack.c.l.b16 %v25
  %v64 = vunpack.c.l.b16 %v26
  %v65 = vunpack.c.l.b16 %v27
  %v66 = vpack.c.b16 %v54, %v53
  %v67 = vpack.c.b16 %v56, %v55
  %v68 = vpack.c.b16 %v58, %v57
  %v69 = vpack.c.b16 %v60, %v59
  %v70 = vpack.c.b16 %v62, %v61
  %v71 = vpack.c.b16 %v64, %v63
  %v72 = vpack.c.b16 %v65, %v65
  %v81 = vunpack.c.l.b16 %v28
  %v82 = vunpack.c.l.b16 %v29
  %v83 = vunpack.c.l.b16 %v30
  %v84 = vunpack.c.l.b16 %v31
  %v85 = vunpack.c.l.b16 %v32
  %v86 = vunpack.c.l.b16 %v33
  %v87 = vunpack.c.l.b16 %v34
  %v88 = vunpack.c.l.b16 %v35
  %v89 = vpack.c.b16 %v82, %v81
  %v90 = vpack.c.b16 %v84, %v83
  %v91 = vpack.c.b16 %v86, %v85
  %v92 = vpack.c.b16 %v88, %v87
  %vm97 = vcmask 523264
  %v99 = vsel %vm97, %v66, 0
  %v102 = vsel %vm97, %v67, 0
  %v105 = vsel %vm97, %v68, 0
  %v108 = vsel %vm97, %v69, 0
  %v111 = vsel %vm97, %v70, 0
  %v114 = vsel %vm97, %v71, 0
  %v117 = vsel %vm97, %v72, 0
  %119 = vmatpush.bf16.msra.mxu0 0
  %120 = vmatpush.bf16.msra.mxu0 0
  %121 = vmatpush.bf16.msra.mxu0 0
  %122 = vmatpush.bf16.msra.mxu0 0
  %123 = vmatpush.bf16.msra.mxu0 %v92
  %124 = vmatpush.bf16.msra.mxu0 %v91
  %125 = vmatpush.bf16.msra.mxu0 %v90
  %126 = vmatpush.bf16.msra.mxu0 %v89
  %127 = vmatmul.bf16.gmra.mxu0 %v99
  %v128 = vpop.f32.mrf.mxu0
  %v129 = vadd.f32 %v38, %v128
  %v130 = vpop.f32.mrf.mxu0
  %v131 = vadd.f32 %v38, %v130
  %132 = vmatmul.bf16.gmra.mxu0 %v102
  %v133 = vpop.f32.mrf.mxu0
  %v134 = vadd.f32 %v38, %v133
  %v135 = vpop.f32.mrf.mxu0
  %v136 = vadd.f32 %v38, %v135
  %137 = vmatmul.bf16.gmra.mxu0 %v105
  %v138 = vpop.f32.mrf.mxu0
  %v139 = vadd.f32 %v38, %v138
  %v140 = vpop.f32.mrf.mxu0
  %v141 = vadd.f32 %v38, %v140
  %142 = vmatmul.bf16.gmra.mxu0 %v108
  %v143 = vpop.f32.mrf.mxu0
  %v144 = vadd.f32 %v38, %v143
  %v145 = vpop.f32.mrf.mxu0
  %v146 = vadd.f32 %v38, %v145
  %147 = vmatmul.bf16.gmra.mxu0 %v111
  %v148 = vpop.f32.mrf.mxu0
  %v149 = vadd.f32 %v38, %v148
  %v150 = vpop.f32.mrf.mxu0
  %v151 = vadd.f32 %v38, %v150
  %152 = vmatmul.bf16.gmra.mxu0 %v114
  %v153 = vpop.f32.mrf.mxu0
  %v154 = vadd.f32 %v38, %v153
  %v155 = vpop.f32.mrf.mxu0
  %v156 = vadd.f32 %v38, %v155
  %157 = vmatmul.bf16.gmra.mxu0 %v117
  %v158 = vpop.f32.mrf.mxu0
  %v159 = vadd.f32 %v38, %v158
  %v160 = vpop.f32.mrf.mxu0
  %161 = vdwg.mxu0
  %v162 = vmax.f32 %v129, 0.0
  %v163 = vmax.f32 %v131, 0.0
  %v164 = vmax.f32 %v134, 0.0
  %v165 = vmax.f32 %v136, 0.0
  %v166 = vmax.f32 %v139, 0.0
  %v167 = vmax.f32 %v141, 0.0
  %v168 = vmax.f32 %v144, 0.0
  %v169 = vmax.f32 %v146, 0.0
  %v170 = vmax.f32 %v149, 0.0
  %v171 = vmax.f32 %v151, 0.0
  %v172 = vmax.f32 %v154, 0.0
  %v173 = vmax.f32 %v156, 0.0
  %v174 = vmax.f32 %v159, 0.0
  %v175 = vpack.c.bf16 %v162, %v162
  %v176 = vpack.c.bf16 %v163, %v163
  %v177 = vpack.c.bf16 %v164, %v164
  %v178 = vpack.c.bf16 %v165, %v165
  %v179 = vpack.c.bf16 %v166, %v166
  %v180 = vpack.c.bf16 %v167, %v167
  %v181 = vpack.c.bf16 %v168, %v168
  %v182 = vpack.c.bf16 %v169, %v169
  %v183 = vpack.c.bf16 %v170, %v170
  %v184 = vpack.c.bf16 %v171, %v171
  %v185 = vpack.c.bf16 %v172, %v172
  %v186 = vpack.c.bf16 %v173, %v173
  %v187 = vpack.c.bf16 %v174, %v174
  %vm188 = vcmask 60416
  %189 = vst.msk [vmem:[%s3] sm:$0xf] %vm188, %v175
  %190 = vst.msk [vmem:[%s3 + $0x4] sm:$0xf] %vm188, %v176
  %191 = vst.msk [vmem:[%s3 + $0x8] sm:$0xf] %vm188, %v177
  %192 = vst.msk [vmem:[%s3 + $0xc] sm:$0xf] %vm188, %v178
  %193 = vst.msk [vmem:[%s3 + $0x10] sm:$0xf] %vm188, %v179
  %194 = vst.msk [vmem:[%s3 + $0x14] sm:$0xf] %vm188, %v180
  %195 = vst.msk [vmem:[%s3 + $0x18] sm:$0xf] %vm188, %v181
  %196 = vst.msk [vmem:[%s3 + $0x1c] sm:$0xf] %vm188, %v182
  %197 = vst.msk [vmem:[%s3 + $0x20] sm:$0xf] %vm188, %v183
  %198 = vst.msk [vmem:[%s3 + $0x24] sm:$0xf] %vm188, %v184
  %199 = vst.msk [vmem:[%s3 + $0x28] sm:$0xf] %vm188, %v185
  %200 = vst.msk [vmem:[%s3 + $0x2c] sm:$0xf] %vm188, %v186
  %vm201 = vcmask 57344
  %202 = vst.msk [vmem:[%s3 + $0x30] sm:$0x1] %vm201, %v187
  // Predicated region
  $region14: #{tpu_custom_call.1} parent=0 // pred_check
    _
  $region15: #{tpu_custom_call.1} parent=0 // pred_check_branch
    %204 = sbr.rel (0) target = $region17
  $region16: #{tpu_custom_call.1} parent=0 // pred_region
    _
  $region17: #{tpu_custom_call.1} parent=0 // pred_fallthru
    _
  // Predicated region
  $region18: #{tpu_custom_call.1} parent=0 // pred_check
    _
  $region19: #{tpu_custom_call.1} parent=0 // pred_check_branch
    %206 = sbr.rel (0) target = $region21
  $region20: #{tpu_custom_call.1} parent=0 // pred_region
    _
  $region21: #{tpu_custom_call.1} parent=0 // pred_fallthru
    _

</llo_original>
